<compile_context>
chip_gen: v7x
topology: tpu7x:2x2x1
jax: 0.10.0
libtpu: 0.0.40
codegen_flags: <defaults>
</compile_context>

<pallas_src>
import math
import jax
import jax.numpy as jnp
from jax.experimental import pallas as pl
from jax.experimental.pallas import tpu as pltpu  # noqa: F401  (TPU backend)


def _round_up(x, m):
    return ((x + m - 1) // m) * m


def _gnn_node_fused_kernel(x_ref, w_ref, p_ref, o_ref):
    """Fused MLP stack: L x (Linear -> LeakyReLU(0.2) -> BatchNorm1d train)."""
    num_layers = w_ref.shape[0]
    inv_n = 1.0 / x_ref.shape[0]
    x = x_ref[...]                                  # (N, C_PAD) f32, VMEM-resident

    for layer in range(num_layers):                 # static unroll, L is small
        w = w_ref[layer]                            # (C_PAD, C_PAD)
        p = p_ref[layer]                            # (3, C_PAD): bias, gamma, beta
        bias = p[0:1, :]
        gamma = p[1:2, :]
        beta = p[2:3, :]

        # Linear (+ bias) on the MXU.  Padded lanes stay exactly zero.
        y = jnp.dot(x, w, preferred_element_type=jnp.float32) + bias

        # LeakyReLU with negative_slope = 0.2 (single VPU select).
        y = jnp.where(y > 0, y, 0.2 * y)

        # BatchNorm1d (training): single-pass batch stats, biased variance.
        mean = jnp.sum(y, axis=0, keepdims=True) * inv_n
        mean_sq = jnp.sum(y * y, axis=0, keepdims=True) * inv_n
        var = jnp.maximum(mean_sq - mean * mean, 0.0)   # FP-safety clamp
        scale = jax.lax.rsqrt(var + 1e-5) * gamma       # fold gamma into inv_std (EUP)
        x = (y - mean) * scale + beta

    o_ref[...] = x                                  # lane-dense (N, C_PAD) store


def gnn_node_forward(x, params, out_channels):
    """GNN_Node.forward for batch size > 1 (BN path), single fused pallas_call."""
    n, c_in = x.shape
    num_layers = len(params)

    # Pad every channel dimension to one common lane-dense width (multiple of 128).
    max_c = max([c_in] + [w.shape[1] for (w, _, _, _) in params])
    c_pad = _round_up(max_c, 128)

    # Stack / pad parameters: weights -> (L, C_PAD, C_PAD), (b, gamma, beta) -> (L, 3, C_PAD).
    w_list, p_list = [], []
    for (w, b, gamma, beta) in params:
        ci, co = w.shape
        wp = jnp.zeros((c_pad, c_pad), jnp.float32).at[:ci, :co].set(w)
        pp = (jnp.zeros((3, c_pad), jnp.float32)
              .at[0, :co].set(b)
              .at[1, :co].set(gamma)
              .at[2, :co].set(beta))
        w_list.append(wp)
        p_list.append(pp)
    w_stacked = jnp.stack(w_list)                   # (L, C_PAD, C_PAD)
    p_stacked = jnp.stack(p_list)                   # (L, 3, C_PAD)

    x_pad = jnp.zeros((n, c_pad), jnp.float32).at[:, :c_in].set(x)

    out_pad = pl.pallas_call(
        _gnn_node_fused_kernel,
        out_shape=jax.ShapeDtypeStruct((n, c_pad), jnp.float32),
        in_specs=[
            pl.BlockSpec((n, c_pad), lambda: (0, 0)),
            pl.BlockSpec((num_layers, c_pad, c_pad), lambda: (0, 0, 0)),
            pl.BlockSpec((num_layers, 3, c_pad), lambda: (0, 0, 0)),
        ],
        out_specs=pl.BlockSpec((n, c_pad), lambda: (0, 0)),
    )(x_pad, w_stacked, p_stacked)

    return out_pad[:, :out_channels]


def init_gnn_node_params(key, in_channels, hidden_channels, out_channels, num_hidden):
    """Deterministic parameter init mirroring MLP.initialize_weights()."""
    channels = [in_channels] + [hidden_channels] * num_hidden + [out_channels]
    params = []
    for i in range(len(channels) - 1):
        c_in, c_out = channels[i], channels[i + 1]
        key, kw, kb = jax.random.split(key, 3)
        # Xavier uniform for Linear weight; stored pre-transposed as (C_in, C_out).
        bound_w = math.sqrt(6.0 / (c_in + c_out))
        w = jax.random.uniform(kw, (c_in, c_out), jnp.float32, -bound_w, bound_w)
        # PyTorch default Linear bias init: U(-1/sqrt(fan_in), 1/sqrt(fan_in)).
        bound_b = 1.0 / math.sqrt(c_in)
        b = jax.random.uniform(kb, (c_out,), jnp.float32, -bound_b, bound_b)
        # BatchNorm1d: weight=1 (initialize_weights), bias=0 (default).
        gamma = jnp.ones((c_out,), jnp.float32)
        beta = jnp.zeros((c_out,), jnp.float32)
        params.append((w, b, gamma, beta))
    return params


def _reference_forward(x, params):
    """Plain-JAX reference (two-pass variance) for correctness checking."""
    for (w, b, gamma, beta) in params:
        y = x @ w + b[None, :]
        y = jnp.where(y > 0, y, 0.2 * y)
        mean = jnp.mean(y, axis=0, keepdims=True)
        var = jnp.mean((y - mean) ** 2, axis=0, keepdims=True)
        x = (y - mean) / jnp.sqrt(var + 1e-5) * gamma[None, :] + beta[None, :]
    return x


if __name__ == "__main__":
    # Small, forward-consistent shapes: N nodes, feature dims per GNN_Node.
    N = 8
    in_channels, hidden_channels, out_channels, num_hidden = 16, 32, 8, 2

    key = jax.random.PRNGKey(0)
    key, kx = jax.random.split(key)
    x = jax.random.normal(kx, (N, in_channels), jnp.float32)

    params = init_gnn_node_params(key, in_channels, hidden_channels,
                                  out_channels, num_hidden)

    out = gnn_node_forward(x, params, out_channels)
    out = jax.block_until_ready(out)

    ref = _reference_forward(x, params)
    assert out.shape == (N, out_channels)
    assert jnp.allclose(out, ref, atol=1e-4, rtol=1e-4), "mismatch vs reference"

    print("KERNEL_OK")
</pallas_src>

<mosaic_0001>
module attributes {stable_mosaic.version = 11 : i64} {
  func.func @_gnn_node_fused_kernel(%arg0: memref<8x128xf32, #tpu.memory_space<vmem>>, %arg1: memref<3x128x128xf32, #tpu.memory_space<vmem>>, %arg2: memref<3x3x128xf32, #tpu.memory_space<vmem>>, %arg3: memref<8x128xf32, #tpu.memory_space<vmem>>) attributes {dimension_semantics = [], scalar_prefetch = 0 : i64, scratch_operands = 0 : i64, tpu.core_type = #tpu.core_type<tc>} {
    %c0 = arith.constant 0 : index
    %c0_0 = arith.constant 0 : index
    %0 = vector.load %arg0[%c0, %c0_0] : memref<8x128xf32, #tpu.memory_space<vmem>>, vector<8x128xf32>
    %c0_1 = arith.constant 0 : index
    %c0_2 = arith.constant 0 : index
    %c0_3 = arith.constant 0 : index
    %1 = vector.load %arg1[%c0_1, %c0_2, %c0_3] : memref<3x128x128xf32, #tpu.memory_space<vmem>>, vector<1x128x128xf32>
    %2 = vector.shape_cast %1 : vector<1x128x128xf32> to vector<128x128xf32>
    %c0_4 = arith.constant 0 : index
    %c0_5 = arith.constant 0 : index
    %c0_6 = arith.constant 0 : index
    %3 = vector.load %arg2[%c0_4, %c0_5, %c0_6] : memref<3x3x128xf32, #tpu.memory_space<vmem>>, vector<1x3x128xf32>
    %4 = vector.shape_cast %3 : vector<1x3x128xf32> to vector<3x128xf32>
    %5 = vector.extract_strided_slice %4 {offsets = [0, 0], sizes = [1, 128], strides = [1, 1]} : vector<3x128xf32> to vector<1x128xf32>
    %6 = vector.extract_strided_slice %4 {offsets = [1, 0], sizes = [1, 128], strides = [1, 1]} : vector<3x128xf32> to vector<1x128xf32>
    %7 = vector.extract_strided_slice %4 {offsets = [2, 0], sizes = [1, 128], strides = [1, 1]} : vector<3x128xf32> to vector<1x128xf32>
    %cst = arith.constant dense<0.000000e+00> : vector<8x128xf32>
    %8 = tpu.matmul %0, %2, %cst {dimension_numbers = #tpu.dot_dimension_numbers<[1], [0], [0], [1], [0, 0, 1, 1], [], []>} : vector<8x128xf32>, vector<128x128xf32>, vector<8x128xf32> -> vector<8x128xf32>
    %9 = vector.broadcast %5 : vector<1x128xf32> to vector<8x128xf32>
    %10 = arith.addf %8, %9 : vector<8x128xf32>
    %cst_7 = arith.constant 0.000000e+00 : f32
    %11 = vector.broadcast %cst_7 : f32 to vector<8x128xf32>
    %12 = arith.cmpf ogt, %10, %11 : vector<8x128xf32>
    %cst_8 = arith.constant 2.000000e-01 : f32
    %13 = vector.broadcast %cst_8 : f32 to vector<8x128xf32>
    %14 = arith.mulf %13, %10 : vector<8x128xf32>
    %15 = arith.select %12, %10, %14 : vector<8x128xi1>, vector<8x128xf32>
    %cst_9 = arith.constant dense<0.000000e+00> : vector<128xf32>
    %16 = vector.multi_reduction <add>, %15, %cst_9 [0] : vector<8x128xf32> to vector<128xf32>
    %17 = vector.shape_cast %16 : vector<128xf32> to vector<1x128xf32>
    %cst_10 = arith.constant 1.250000e-01 : f32
    %18 = vector.broadcast %cst_10 : f32 to vector<1x128xf32>
    %19 = arith.mulf %17, %18 : vector<1x128xf32>
    %20 = arith.mulf %15, %15 : vector<8x128xf32>
    %cst_11 = arith.constant dense<0.000000e+00> : vector<128xf32>
    %21 = vector.multi_reduction <add>, %20, %cst_11 [0] : vector<8x128xf32> to vector<128xf32>
    %22 = vector.shape_cast %21 : vector<128xf32> to vector<1x128xf32>
    %cst_12 = arith.constant 1.250000e-01 : f32
    %23 = vector.broadcast %cst_12 : f32 to vector<1x128xf32>
    %24 = arith.mulf %22, %23 : vector<1x128xf32>
    %25 = arith.mulf %19, %19 : vector<1x128xf32>
    %26 = arith.subf %24, %25 : vector<1x128xf32>
    %cst_13 = arith.constant 0.000000e+00 : f32
    %27 = vector.broadcast %cst_13 : f32 to vector<1x128xf32>
    %28 = arith.maximumf %26, %27 : vector<1x128xf32>
    %cst_14 = arith.constant 9.99999974E-6 : f32
    %29 = vector.broadcast %cst_14 : f32 to vector<1x128xf32>
    %30 = arith.addf %28, %29 : vector<1x128xf32>
    %31 = math.rsqrt %30 : vector<1x128xf32>
    %32 = arith.mulf %31, %6 : vector<1x128xf32>
    %33 = vector.broadcast %19 : vector<1x128xf32> to vector<8x128xf32>
    %34 = arith.subf %15, %33 : vector<8x128xf32>
    %35 = vector.broadcast %32 : vector<1x128xf32> to vector<8x128xf32>
    %36 = arith.mulf %34, %35 : vector<8x128xf32>
    %37 = vector.broadcast %7 : vector<1x128xf32> to vector<8x128xf32>
    %38 = arith.addf %36, %37 : vector<8x128xf32>
    %c1 = arith.constant 1 : index
    %c0_15 = arith.constant 0 : index
    %c0_16 = arith.constant 0 : index
    %39 = vector.load %arg1[%c1, %c0_15, %c0_16] : memref<3x128x128xf32, #tpu.memory_space<vmem>>, vector<1x128x128xf32>
    %40 = vector.shape_cast %39 : vector<1x128x128xf32> to vector<128x128xf32>
    %c1_17 = arith.constant 1 : index
    %c0_18 = arith.constant 0 : index
    %c0_19 = arith.constant 0 : index
    %41 = vector.load %arg2[%c1_17, %c0_18, %c0_19] : memref<3x3x128xf32, #tpu.memory_space<vmem>>, vector<1x3x128xf32>
    %42 = vector.shape_cast %41 : vector<1x3x128xf32> to vector<3x128xf32>
    %43 = vector.extract_strided_slice %42 {offsets = [0, 0], sizes = [1, 128], strides = [1, 1]} : vector<3x128xf32> to vector<1x128xf32>
    %44 = vector.extract_strided_slice %42 {offsets = [1, 0], sizes = [1, 128], strides = [1, 1]} : vector<3x128xf32> to vector<1x128xf32>
    %45 = vector.extract_strided_slice %42 {offsets = [2, 0], sizes = [1, 128], strides = [1, 1]} : vector<3x128xf32> to vector<1x128xf32>
    %cst_20 = arith.constant dense<0.000000e+00> : vector<8x128xf32>
    %46 = tpu.matmul %38, %40, %cst_20 {dimension_numbers = #tpu.dot_dimension_numbers<[1], [0], [0], [1], [0, 0, 1, 1], [], []>} : vector<8x128xf32>, vector<128x128xf32>, vector<8x128xf32> -> vector<8x128xf32>
    %47 = vector.broadcast %43 : vector<1x128xf32> to vector<8x128xf32>
    %48 = arith.addf %46, %47 : vector<8x128xf32>
    %cst_21 = arith.constant 0.000000e+00 : f32
    %49 = vector.broadcast %cst_21 : f32 to vector<8x128xf32>
    %50 = arith.cmpf ogt, %48, %49 : vector<8x128xf32>
    %cst_22 = arith.constant 2.000000e-01 : f32
    %51 = vector.broadcast %cst_22 : f32 to vector<8x128xf32>
    %52 = arith.mulf %51, %48 : vector<8x128xf32>
    %53 = arith.select %50, %48, %52 : vector<8x128xi1>, vector<8x128xf32>
    %cst_23 = arith.constant dense<0.000000e+00> : vector<128xf32>
    %54 = vector.multi_reduction <add>, %53, %cst_23 [0] : vector<8x128xf32> to vector<128xf32>
    %55 = vector.shape_cast %54 : vector<128xf32> to vector<1x128xf32>
    %cst_24 = arith.constant 1.250000e-01 : f32
    %56 = vector.broadcast %cst_24 : f32 to vector<1x128xf32>
    %57 = arith.mulf %55, %56 : vector<1x128xf32>
    %58 = arith.mulf %53, %53 : vector<8x128xf32>
    %cst_25 = arith.constant dense<0.000000e+00> : vector<128xf32>
    %59 = vector.multi_reduction <add>, %58, %cst_25 [0] : vector<8x128xf32> to vector<128xf32>
    %60 = vector.shape_cast %59 : vector<128xf32> to vector<1x128xf32>
    %cst_26 = arith.constant 1.250000e-01 : f32
    %61 = vector.broadcast %cst_26 : f32 to vector<1x128xf32>
    %62 = arith.mulf %60, %61 : vector<1x128xf32>
    %63 = arith.mulf %57, %57 : vector<1x128xf32>
    %64 = arith.subf %62, %63 : vector<1x128xf32>
    %cst_27 = arith.constant 0.000000e+00 : f32
    %65 = vector.broadcast %cst_27 : f32 to vector<1x128xf32>
    %66 = arith.maximumf %64, %65 : vector<1x128xf32>
    %cst_28 = arith.constant 9.99999974E-6 : f32
    %67 = vector.broadcast %cst_28 : f32 to vector<1x128xf32>
    %68 = arith.addf %66, %67 : vector<1x128xf32>
    %69 = math.rsqrt %68 : vector<1x128xf32>
    %70 = arith.mulf %69, %44 : vector<1x128xf32>
    %71 = vector.broadcast %57 : vector<1x128xf32> to vector<8x128xf32>
    %72 = arith.subf %53, %71 : vector<8x128xf32>
    %73 = vector.broadcast %70 : vector<1x128xf32> to vector<8x128xf32>
    %74 = arith.mulf %72, %73 : vector<8x128xf32>
    %75 = vector.broadcast %45 : vector<1x128xf32> to vector<8x128xf32>
    %76 = arith.addf %74, %75 : vector<8x128xf32>
    %c2 = arith.constant 2 : index
    %c0_29 = arith.constant 0 : index
    %c0_30 = arith.constant 0 : index
    %77 = vector.load %arg1[%c2, %c0_29, %c0_30] : memref<3x128x128xf32, #tpu.memory_space<vmem>>, vector<1x128x128xf32>
    %78 = vector.shape_cast %77 : vector<1x128x128xf32> to vector<128x128xf32>
    %c2_31 = arith.constant 2 : index
    %c0_32 = arith.constant 0 : index
    %c0_33 = arith.constant 0 : index
    %79 = vector.load %arg2[%c2_31, %c0_32, %c0_33] : memref<3x3x128xf32, #tpu.memory_space<vmem>>, vector<1x3x128xf32>
    %80 = vector.shape_cast %79 : vector<1x3x128xf32> to vector<3x128xf32>
    %81 = vector.extract_strided_slice %80 {offsets = [0, 0], sizes = [1, 128], strides = [1, 1]} : vector<3x128xf32> to vector<1x128xf32>
    %82 = vector.extract_strided_slice %80 {offsets = [1, 0], sizes = [1, 128], strides = [1, 1]} : vector<3x128xf32> to vector<1x128xf32>
    %83 = vector.extract_strided_slice %80 {offsets = [2, 0], sizes = [1, 128], strides = [1, 1]} : vector<3x128xf32> to vector<1x128xf32>
    %cst_34 = arith.constant dense<0.000000e+00> : vector<8x128xf32>
    %84 = tpu.matmul %76, %78, %cst_34 {dimension_numbers = #tpu.dot_dimension_numbers<[1], [0], [0], [1], [0, 0, 1, 1], [], []>} : vector<8x128xf32>, vector<128x128xf32>, vector<8x128xf32> -> vector<8x128xf32>
    %85 = vector.broadcast %81 : vector<1x128xf32> to vector<8x128xf32>
    %86 = arith.addf %84, %85 : vector<8x128xf32>
    %cst_35 = arith.constant 0.000000e+00 : f32
    %87 = vector.broadcast %cst_35 : f32 to vector<8x128xf32>
    %88 = arith.cmpf ogt, %86, %87 : vector<8x128xf32>
    %cst_36 = arith.constant 2.000000e-01 : f32
    %89 = vector.broadcast %cst_36 : f32 to vector<8x128xf32>
    %90 = arith.mulf %89, %86 : vector<8x128xf32>
    %91 = arith.select %88, %86, %90 : vector<8x128xi1>, vector<8x128xf32>
    %cst_37 = arith.constant dense<0.000000e+00> : vector<128xf32>
    %92 = vector.multi_reduction <add>, %91, %cst_37 [0] : vector<8x128xf32> to vector<128xf32>
    %93 = vector.shape_cast %92 : vector<128xf32> to vector<1x128xf32>
    %cst_38 = arith.constant 1.250000e-01 : f32
    %94 = vector.broadcast %cst_38 : f32 to vector<1x128xf32>
    %95 = arith.mulf %93, %94 : vector<1x128xf32>
    %96 = arith.mulf %91, %91 : vector<8x128xf32>
    %cst_39 = arith.constant dense<0.000000e+00> : vector<128xf32>
    %97 = vector.multi_reduction <add>, %96, %cst_39 [0] : vector<8x128xf32> to vector<128xf32>
    %98 = vector.shape_cast %97 : vector<128xf32> to vector<1x128xf32>
    %cst_40 = arith.constant 1.250000e-01 : f32
    %99 = vector.broadcast %cst_40 : f32 to vector<1x128xf32>
    %100 = arith.mulf %98, %99 : vector<1x128xf32>
    %101 = arith.mulf %95, %95 : vector<1x128xf32>
    %102 = arith.subf %100, %101 : vector<1x128xf32>
    %cst_41 = arith.constant 0.000000e+00 : f32
    %103 = vector.broadcast %cst_41 : f32 to vector<1x128xf32>
    %104 = arith.maximumf %102, %103 : vector<1x128xf32>
    %cst_42 = arith.constant 9.99999974E-6 : f32
    %105 = vector.broadcast %cst_42 : f32 to vector<1x128xf32>
    %106 = arith.addf %104, %105 : vector<1x128xf32>
    %107 = math.rsqrt %106 : vector<1x128xf32>
    %108 = arith.mulf %107, %82 : vector<1x128xf32>
    %109 = vector.broadcast %95 : vector<1x128xf32> to vector<8x128xf32>
    %110 = arith.subf %91, %109 : vector<8x128xf32>
    %111 = vector.broadcast %108 : vector<1x128xf32> to vector<8x128xf32>
    %112 = arith.mulf %110, %111 : vector<8x128xf32>
    %113 = vector.broadcast %83 : vector<1x128xf32> to vector<8x128xf32>
    %114 = arith.addf %112, %113 : vector<8x128xf32>
    %c0_43 = arith.constant 0 : index
    %c0_44 = arith.constant 0 : index
    %115 = vector.load %arg3[%c0_43, %c0_44] : memref<8x128xf32, #tpu.memory_space<vmem>>, vector<8x128xf32>
    tpu.vector_store %arg3[%c0_43, %c0_44], %114 {strides = array<i32>} : memref<8x128xf32, #tpu.memory_space<vmem>>, vector<8x128xf32>,
    return
  }
}

</mosaic_0001>

<llo_original>
// kernel: tpu_custom_call.1
$region0: #{tpu_custom_call.1}
  #allocation0 [shape = 'u32[]', space=smem, size = 0x4, offset = 0x4, fixed_abs, tag = 'smem constant byte address 0x4 - core index']
  #allocation1 [shape = 'u32[144,128]{1,0:T(1,128)}', space=vmem, size = 0x12000, scoped, tag = 'internal scratch']
  %s0 = inlined_call_operand.hbm [shape: f32[8,128], index: 0, kind: input, shape index: {}]
  %s1 = inlined_call_operand.hbm [shape: f32[3,128,128], index: 1, kind: input, shape index: {}]
  %s2 = inlined_call_operand.hbm [shape: f32[3,3,128], index: 2, kind: input, shape index: {}]
  %s3 = inlined_call_operand.hbm [shape: f32[8,128], index: 3, kind: output, shape index: {}]
  %s4 = sld [smem:[#allocation0]]
  $region34: #{tpu_custom_call.1} parent=0
    _
  %s6 = ssub.s32 1, %s4
  %s7 = scalar_select 0, %s6, %s4
  $region1: #{tpu_custom_call.1} parent=0
    #allocation2 [shape = 'u8[4096]{0}', space=vmem, size = 0x1000, scoped, tag = 'input window, operand 0, single buffered']
    #allocation3 [shape = 's32[1]{0}', space=sflag, size = 0x4, scoped, tag = 'scoped memory for tpu_custom_call.1']
    #allocation4 [shape = 's32[1]{0}', space=sflag, size = 0x4, scoped, tag = 'scoped memory for tpu_custom_call.1']
    #allocation5 [shape = 'u8[196608]{0}', space=vmem, size = 0x30000, scoped, tag = 'input window, operand 1, single buffered']
    #allocation6 [shape = 's32[1]{0}', space=sflag, size = 0x4, scoped, tag = 'scoped memory for tpu_custom_call.1']
    #allocation7 [shape = 'u8[6144]{0}', space=vmem, size = 0x1800, scoped, tag = 'input window, operand 2, single buffered']
    #allocation8 [shape = 'u8[4096]{0}', space=vmem, size = 0x1000, scoped, tag = 'output window, operand 0, single buffered']
    %8 = vsyncpa [#allocation3], 0
    %9 = vsyncpa [#allocation6], 0
    %10 = vsyncpa [#allocation4], 0
    // Predicated region
    $region2: #{tpu_custom_call.1} parent=1 // pred_check
      _
    $region3: #{tpu_custom_call.1} parent=1 // pred_check_branch
      %12 = sbr.rel (0) target = $region5
    $region4: #{tpu_custom_call.1} parent=1 // pred_region
      %s14 = ssub.s32 128, 128
      %15 = vsyncadd [#allocation3], %s14
      %s17 = sshll.u32 [#allocation2], 4
      %s18 = int_to_ptr.vmem [resolvable:$true] %s17
      %20 = dma.hbm_to_vmem [thread:$0]  %s0, 128, %s18, [#allocation3]
    $region5: #{tpu_custom_call.1} parent=1 // pred_fallthru
      _
    // Predicated region
    $region6: #{tpu_custom_call.1} parent=1 // pred_check
      _
    $region7: #{tpu_custom_call.1} parent=1 // pred_check_branch
      %22 = sbr.rel (0) target = $region9
    $region8: #{tpu_custom_call.1} parent=1 // pred_region
      %s24 = ssub.s32 6144, 6144
      %25 = vsyncadd [#allocation6], %s24
      %s26 = sshll.u32 [#allocation5], 4
      %s27 = int_to_ptr.vmem [resolvable:$true] %s26
      %32 = dma.hbm_to_vmem [thread:$0]  %s1, 6144, %s27, [#allocation6], 128, 128, 8
    $region9: #{tpu_custom_call.1} parent=1 // pred_fallthru
      _
    // Predicated region
    $region10: #{tpu_custom_call.1} parent=1 // pred_check
      _
    $region11: #{tpu_custom_call.1} parent=1 // pred_check_branch
      %34 = sbr.rel (0) target = $region13
    $region12: #{tpu_custom_call.1} parent=1 // pred_region
      %s36 = ssub.s32 192, 192
      %37 = vsyncadd [#allocation6], %s36
      %s38 = sshll.u32 [#allocation7], 4
      %s39 = int_to_ptr.vmem [resolvable:$true] %s38
      %44 = dma.hbm_to_vmem [thread:$0]  %s2, 192, %s39, [#allocation6], 64, 64, 4
    $region13: #{tpu_custom_call.1} parent=1 // pred_fallthru
      _
    // Predicated region
    $region14: #{tpu_custom_call.1} parent=1 // pred_check
      _
    $region15: #{tpu_custom_call.1} parent=1 // pred_check_branch
      %46 = sbr.rel (0) target = $region17
    $region16: #{tpu_custom_call.1} parent=1 // pred_region
      %47 = dma.done [#allocation3], 128
    $region17: #{tpu_custom_call.1} parent=1 // pred_fallthru
      _
    // Predicated region
    $region18: #{tpu_custom_call.1} parent=1 // pred_check
      _
    $region19: #{tpu_custom_call.1} parent=1 // pred_check_branch
      %49 = sbr.rel (0) target = $region21
    $region20: #{tpu_custom_call.1} parent=1 // pred_region
      %50 = dma.done [#allocation6], 6144
    $region21: #{tpu_custom_call.1} parent=1 // pred_fallthru
      _
    // Predicated region
    $region22: #{tpu_custom_call.1} parent=1 // pred_check
      _
    $region23: #{tpu_custom_call.1} parent=1 // pred_check_branch
      %52 = sbr.rel (0) target = $region25
    $region24: #{tpu_custom_call.1} parent=1 // pred_region
      %53 = dma.done [#allocation6], 192
    $region25: #{tpu_custom_call.1} parent=1 // pred_fallthru
      _
    %v54 = vld [vmem:[#allocation2] sm:$0xff]
    %v55 = vld [vmem:[#allocation5] sm:$0xff]
    %v56 = vld [vmem:[#allocation5 + $0x8] sm:$0xff]
    %v57 = vld [vmem:[#allocation5 + $0x10] sm:$0xff]
    %v58 = vld [vmem:[#allocation5 + $0x18] sm:$0xff]
    %v59 = vld [vmem:[#allocation5 + $0x20] sm:$0xff]
    %v60 = vld [vmem:[#allocation5 + $0x28] sm:$0xff]
    %v61 = vld [vmem:[#allocation5 + $0x30] sm:$0xff]
    %v62 = vld [vmem:[#allocation5 + $0x38] sm:$0xff]
    %v63 = vld [vmem:[#allocation5 + $0x40] sm:$0xff]
    %v64 = vld [vmem:[#allocation5 + $0x48] sm:$0xff]
    %v65 = vld [vmem:[#allocation5 + $0x50] sm:$0xff]
    %v66 = vld [vmem:[#allocation5 + $0x58] sm:$0xff]
    %v67 = vld [vmem:[#allocation5 + $0x60] sm:$0xff]
    %v68 = vld [vmem:[#allocation5 + $0x68] sm:$0xff]
    %v69 = vld [vmem:[#allocation5 + $0x70] sm:$0xff]
    %v70 = vld [vmem:[#allocation5 + $0x78] sm:$0xff]
    %v71 = vld [vmem:[#allocation7] sm:$0x7]
    %v72 = vlaneseq
    %v73 = vshrl.u32 %v72, 7
    %v74 = vsub.s32 0, %v73
    %v75 = vrot.slane %v71, %v74
    %76 = vmatprep.subr.mxu0 0.0
    %77 = vmatpush1.msra.mxu0 %v55
    %78 = vmatprep.subr.mxu0 0.0
    %79 = vmatpush1.msra.mxu0 %v56
    %80 = vmatprep.subr.mxu0 0.0
    %81 = vmatpush1.msra.mxu0 %v57
    %82 = vmatprep.subr.mxu0 0.0
    %83 = vmatpush1.msra.mxu0 %v58
    %84 = vmatprep.subr.mxu0 0.0
    %85 = vmatpush1.msra.mxu0 %v59
    %86 = vmatprep.subr.mxu0 0.0
    %87 = vmatpush1.msra.mxu0 %v60
    %88 = vmatprep.subr.mxu0 0.0
    %89 = vmatpush1.msra.mxu0 %v61
    %90 = vmatprep.subr.mxu0 0.0
    %91 = vmatpush1.msra.mxu0 %v62
    %92 = vmatprep.subr.mxu0 0.0
    %93 = vmatpush1.msra.mxu0 %v63
    %94 = vmatprep.subr.mxu0 0.0
    %95 = vmatpush1.msra.mxu0 %v64
    %96 = vmatprep.subr.mxu0 0.0
    %97 = vmatpush1.msra.mxu0 %v65
    %98 = vmatprep.subr.mxu0 0.0
    %99 = vmatpush1.msra.mxu0 %v66
    %100 = vmatprep.subr.mxu0 0.0
    %101 = vmatpush1.msra.mxu0 %v67
    %102 = vmatprep.subr.mxu0 0.0
    %103 = vmatpush1.msra.mxu0 %v68
    %104 = vmatprep.subr.mxu0 0.0
    %105 = vmatpush1.msra.mxu0 %v69
    %106 = vmatprep.subr.mxu0 0.0
    %107 = vmatpush1.msra.mxu0 %v70
    %108 = vmatprep.subr.mxu0 0.0
    %109 = vmatpush1.msra.mxu0 0.0
    %110 = vmatprep.subr.mxu0 0.0
    %111 = vmatpush1.msra.mxu0 0.0
    %112 = vmatprep.subr.mxu0 0.0
    %113 = vmatpush1.msra.mxu0 0.0
    %114 = vmatprep.subr.mxu0 0.0
    %115 = vmatpush1.msra.mxu0 0.0
    %116 = vmatprep.subr.mxu0 0.0
    %117 = vmatpush1.msra.mxu0 0.0
    %118 = vmatprep.subr.mxu0 0.0
    %119 = vmatpush1.msra.mxu0 0.0
    %120 = vmatprep.subr.mxu0 0.0
    %121 = vmatpush1.msra.mxu0 0.0
    %122 = vmatprep.subr.mxu0 0.0
    %123 = vmatpush1.msra.mxu0 0.0
    %124 = vmatprep.subr.mxu0 0.0
    %125 = vmatpush1.msra.mxu0 0.0
    %126 = vmatprep.subr.mxu0 0.0
    %127 = vmatpush1.msra.mxu0 0.0
    %128 = vmatprep.subr.mxu0 0.0
    %129 = vmatpush1.msra.mxu0 0.0
    %130 = vmatprep.subr.mxu0 0.0
    %131 = vmatpush1.msra.mxu0 0.0
    %132 = vmatprep.subr.mxu0 0.0
    %133 = vmatpush1.msra.mxu0 0.0
    %134 = vmatprep.subr.mxu0 0.0
    %135 = vmatpush1.msra.mxu0 0.0
    %136 = vmatprep.subr.mxu0 0.0
    %137 = vmatpush1.msra.mxu0 0.0
    %138 = vmatprep.subr.mxu0 0.0
    %139 = vmatpush1.msra.mxu0 0.0
    %140 = vmatprep.mubr.f32.mxu0 0.0
    %141 = vmatmul.mubr.f32.gmra.mrb[0].mxu0 %v54
    %v142 = vpop.f32.mrb[0].mxu0
    %v143 = vadd.f32 %v75, %v142
    %v144 = vpop.f32.mrb[0].mxu0
    %145 = vdwg.mxu0
    %vm146 = vcmp.gt.f32.partialorder %v143, 0.0
    %v147 = vmul.f32 %v143, 0.2
    %v148 = vsel %vm146, %v143, %v147
    %v149 = vrot.slane %v148, 4
    %v150 = vadd.f32 %v148, %v149
    %v151 = vrot.slane %v150, 2
    %v152 = vadd.f32 %v150, %v151
    %v153 = vrot.slane %v152, 1
    %v154 = vadd.f32 %v152, %v153
    %v155 = vmul.f32 %v154, 0.125
    %v156 = vmul.f32 %v148, %v148
    %v157 = vrot.slane %v156, 4
    %v158 = vadd.f32 %v156, %v157
    %v159 = vrot.slane %v158, 2
    %v160 = vadd.f32 %v158, %v159
    %v161 = vrot.slane %v160, 1
    %v162 = vadd.f32 %v160, %v161
    %v163 = vmul.f32 %v162, 0.125
    %v164 = vmul.f32 %v155, %v155
    %v165 = vsub.f32 %v163, %v164
    %v166 = vmax.f32 %v165, 0.0
    %v167 = vadd.f32 %v166, 1e-05
    %v168 = vrsqrt.pop %v167
    %v169 = vmul.f32 %v168, %v71
    %v170 = vsub.f32 %v148, %v155
    %v171 = vlaneseq
    %v172 = vshrl.u32 %v171, 7
    %v173 = vsub.s32 1, %v172
    %v174 = vrot.slane %v169, %v173
    %v175 = vmul.f32 %v170, %v174
    %v176 = vlaneseq
    %v177 = vshrl.u32 %v176, 7
    %v178 = vsub.s32 2, %v177
    %v179 = vrot.slane %v71, %v178
    %v180 = vadd.f32 %v175, %v179
    %s181 = scalar_lea.vmem [#allocation5], 128
    %v182 = vld [vmem:[%s181] sm:$0xff]
    %v183 = vld [vmem:[%s181 + $0x8] sm:$0xff]
    %v184 = vld [vmem:[%s181 + $0x10] sm:$0xff]
    %v185 = vld [vmem:[%s181 + $0x18] sm:$0xff]
    %v186 = vld [vmem:[%s181 + $0x20] sm:$0xff]
    %v187 = vld [vmem:[%s181 + $0x28] sm:$0xff]
    %v188 = vld [vmem:[%s181 + $0x30] sm:$0xff]
    %v189 = vld [vmem:[%s181 + $0x38] sm:$0xff]
    %v190 = vld [vmem:[%s181 + $0x40] sm:$0xff]
    %v191 = vld [vmem:[%s181 + $0x48] sm:$0xff]
    %v192 = vld [vmem:[%s181 + $0x50] sm:$0xff]
    %v193 = vld [vmem:[%s181 + $0x58] sm:$0xff]
    %v194 = vld [vmem:[%s181 + $0x60] sm:$0xff]
    %v195 = vld [vmem:[%s181 + $0x68] sm:$0xff]
    %v196 = vld [vmem:[%s181 + $0x70] sm:$0xff]
    %v197 = vld [vmem:[%s181 + $0x78] sm:$0xff]
    %s198 = scalar_lea.vmem [#allocation7], 4
    %v199 = vld [vmem:[%s198] sm:$0x7]
    %v200 = vlaneseq
    %v201 = vshrl.u32 %v200, 7
    %v202 = vsub.s32 0, %v201
    %v203 = vrot.slane %v199, %v202
    %204 = vmatprep.subr.mxu0 0.0
    %205 = vmatpush1.msra.mxu0 %v182
    %206 = vmatprep.subr.mxu0 0.0
    %207 = vmatpush1.msra.mxu0 %v183
    %208 = vmatprep.subr.mxu0 0.0
    %209 = vmatpush1.msra.mxu0 %v184
    %210 = vmatprep.subr.mxu0 0.0
    %211 = vmatpush1.msra.mxu0 %v185
    %212 = vmatprep.subr.mxu0 0.0
    %213 = vmatpush1.msra.mxu0 %v186
    %214 = vmatprep.subr.mxu0 0.0
    %215 = vmatpush1.msra.mxu0 %v187
    %216 = vmatprep.subr.mxu0 0.0
    %217 = vmatpush1.msra.mxu0 %v188
    %218 = vmatprep.subr.mxu0 0.0
    %219 = vmatpush1.msra.mxu0 %v189
    %220 = vmatprep.subr.mxu0 0.0
    %221 = vmatpush1.msra.mxu0 %v190
    %222 = vmatprep.subr.mxu0 0.0
    %223 = vmatpush1.msra.mxu0 %v191
    %224 = vmatprep.subr.mxu0 0.0
    %225 = vmatpush1.msra.mxu0 %v192
    %226 = vmatprep.subr.mxu0 0.0
    %227 = vmatpush1.msra.mxu0 %v193
    %228 = vmatprep.subr.mxu0 0.0
    %229 = vmatpush1.msra.mxu0 %v194
    %230 = vmatprep.subr.mxu0 0.0
    %231 = vmatpush1.msra.mxu0 %v195
    %232 = vmatprep.subr.mxu0 0.0
    %233 = vmatpush1.msra.mxu0 %v196
    %234 = vmatprep.subr.mxu0 0.0
    %235 = vmatpush1.msra.mxu0 %v197
    %236 = vmatprep.subr.mxu0 0.0
    %237 = vmatpush1.msra.mxu0 0.0
    %238 = vmatprep.subr.mxu0 0.0
    %239 = vmatpush1.msra.mxu0 0.0
    %240 = vmatprep.subr.mxu0 0.0
    %241 = vmatpush1.msra.mxu0 0.0
    %242 = vmatprep.subr.mxu0 0.0
    %243 = vmatpush1.msra.mxu0 0.0
    %244 = vmatprep.subr.mxu0 0.0
    %245 = vmatpush1.msra.mxu0 0.0
    %246 = vmatprep.subr.mxu0 0.0
    %247 = vmatpush1.msra.mxu0 0.0
    %248 = vmatprep.subr.mxu0 0.0
    %249 = vmatpush1.msra.mxu0 0.0
    %250 = vmatprep.subr.mxu0 0.0
    %251 = vmatpush1.msra.mxu0 0.0
    %252 = vmatprep.subr.mxu0 0.0
    %253 = vmatpush1.msra.mxu0 0.0
    %254 = vmatprep.subr.mxu0 0.0
    %255 = vmatpush1.msra.mxu0 0.0
    %256 = vmatprep.subr.mxu0 0.0
    %257 = vmatpush1.msra.mxu0 0.0
    %258 = vmatprep.subr.mxu0 0.0
    %259 = vmatpush1.msra.mxu0 0.0
    %260 = vmatprep.subr.mxu0 0.0
    %261 = vmatpush1.msra.mxu0 0.0
    %262 = vmatprep.subr.mxu0 0.0
    %263 = vmatpush1.msra.mxu0 0.0
    %264 = vmatprep.subr.mxu0 0.0
    %265 = vmatpush1.msra.mxu0 0.0
    %266 = vmatprep.subr.mxu0 0.0
    %267 = vmatpush1.msra.mxu0 0.0
    %268 = vmatprep.mubr.f32.mxu0 0.0
    %269 = vmatmul.mubr.f32.gmra.mrb[0].mxu0 %v180
    %v270 = vpop.f32.mrb[0].mxu0
    %v271 = vadd.f32 %v203, %v270
    %v272 = vpop.f32.mrb[0].mxu0
    %273 = vdwg.mxu0
    %vm274 = vcmp.gt.f32.partialorder %v271, 0.0
    %v275 = vmul.f32 %v271, 0.2
    %v276 = vsel %vm274, %v271, %v275
    %v277 = vrot.slane %v276, 4
    %v278 = vadd.f32 %v276, %v277
    %v279 = vrot.slane %v278, 2
    %v280 = vadd.f32 %v278, %v279
    %v281 = vrot.slane %v280, 1
    %v282 = vadd.f32 %v280, %v281
    %v283 = vmul.f32 %v282, 0.125
    %v284 = vmul.f32 %v276, %v276
    %v285 = vrot.slane %v284, 4
    %v286 = vadd.f32 %v284, %v285
    %v287 = vrot.slane %v286, 2
    %v288 = vadd.f32 %v286, %v287
    %v289 = vrot.slane %v288, 1
    %v290 = vadd.f32 %v288, %v289
    %v291 = vmul.f32 %v290, 0.125
    %v292 = vmul.f32 %v283, %v283
    %v293 = vsub.f32 %v291, %v292
    %v294 = vmax.f32 %v293, 0.0
    %v295 = vadd.f32 %v294, 1e-05
    %v296 = vrsqrt.pop %v295
    %v297 = vmul.f32 %v296, %v199
    %v298 = vsub.f32 %v276, %v283
    %v299 = vlaneseq
    %v300 = vshrl.u32 %v299, 7
    %v301 = vsub.s32 1, %v300
    %v302 = vrot.slane %v297, %v301
    %v303 = vmul.f32 %v298, %v302
    %v304 = vlaneseq
    %v305 = vshrl.u32 %v304, 7
    %v306 = vsub.s32 2, %v305
    %v307 = vrot.slane %v199, %v306
    %v308 = vadd.f32 %v303, %v307
    %s309 = scalar_lea.vmem [#allocation5], 256
    %v310 = vld [vmem:[%s309] sm:$0xff]
    %v311 = vld [vmem:[%s309 + $0x8] sm:$0xff]
    %v312 = vld [vmem:[%s309 + $0x10] sm:$0xff]
    %v313 = vld [vmem:[%s309 + $0x18] sm:$0xff]
    %v314 = vld [vmem:[%s309 + $0x20] sm:$0xff]
    %v315 = vld [vmem:[%s309 + $0x28] sm:$0xff]
    %v316 = vld [vmem:[%s309 + $0x30] sm:$0xff]
    %v317 = vld [vmem:[%s309 + $0x38] sm:$0xff]
    %v318 = vld [vmem:[%s309 + $0x40] sm:$0xff]
    %v319 = vld [vmem:[%s309 + $0x48] sm:$0xff]
    %v320 = vld [vmem:[%s309 + $0x50] sm:$0xff]
    %v321 = vld [vmem:[%s309 + $0x58] sm:$0xff]
    %v322 = vld [vmem:[%s309 + $0x60] sm:$0xff]
    %v323 = vld [vmem:[%s309 + $0x68] sm:$0xff]
    %v324 = vld [vmem:[%s309 + $0x70] sm:$0xff]
    %v325 = vld [vmem:[%s309 + $0x78] sm:$0xff]
    %s326 = scalar_lea.vmem [#allocation7], 8
    %v327 = vld [vmem:[%s326] sm:$0x7]
    %v328 = vlaneseq
    %v329 = vshrl.u32 %v328, 7
    %v330 = vsub.s32 0, %v329
    %v331 = vrot.slane %v327, %v330
    %332 = vmatprep.subr.mxu0 0.0
    %333 = vmatpush1.msra.mxu0 %v310
    %334 = vmatprep.subr.mxu0 0.0
    %335 = vmatpush1.msra.mxu0 %v311
    %336 = vmatprep.subr.mxu0 0.0
    %337 = vmatpush1.msra.mxu0 %v312
    %338 = vmatprep.subr.mxu0 0.0
    %339 = vmatpush1.msra.mxu0 %v313
    %340 = vmatprep.subr.mxu0 0.0
    %341 = vmatpush1.msra.mxu0 %v314
    %342 = vmatprep.subr.mxu0 0.0
    %343 = vmatpush1.msra.mxu0 %v315
    %344 = vmatprep.subr.mxu0 0.0
    %345 = vmatpush1.msra.mxu0 %v316
    %346 = vmatprep.subr.mxu0 0.0
    %347 = vmatpush1.msra.mxu0 %v317
    %348 = vmatprep.subr.mxu0 0.0
    %349 = vmatpush1.msra.mxu0 %v318
    %350 = vmatprep.subr.mxu0 0.0
    %351 = vmatpush1.msra.mxu0 %v319
    %352 = vmatprep.subr.mxu0 0.0
    %353 = vmatpush1.msra.mxu0 %v320
    %354 = vmatprep.subr.mxu0 0.0
    %355 = vmatpush1.msra.mxu0 %v321
    %356 = vmatprep.subr.mxu0 0.0
    %357 = vmatpush1.msra.mxu0 %v322
    %358 = vmatprep.subr.mxu0 0.0
    %359 = vmatpush1.msra.mxu0 %v323
    %360 = vmatprep.subr.mxu0 0.0
    %361 = vmatpush1.msra.mxu0 %v324
    %362 = vmatprep.subr.mxu0 0.0
    %363 = vmatpush1.msra.mxu0 %v325
    %364 = vmatprep.subr.mxu0 0.0
    %365 = vmatpush1.msra.mxu0 0.0
    %366 = vmatprep.subr.mxu0 0.0
    %367 = vmatpush1.msra.mxu0 0.0
    %368 = vmatprep.subr.mxu0 0.0
    %369 = vmatpush1.msra.mxu0 0.0
    %370 = vmatprep.subr.mxu0 0.0
    %371 = vmatpush1.msra.mxu0 0.0
    %372 = vmatprep.subr.mxu0 0.0
    %373 = vmatpush1.msra.mxu0 0.0
    %374 = vmatprep.subr.mxu0 0.0
    %375 = vmatpush1.msra.mxu0 0.0
    %376 = vmatprep.subr.mxu0 0.0
    %377 = vmatpush1.msra.mxu0 0.0
    %378 = vmatprep.subr.mxu0 0.0
    %379 = vmatpush1.msra.mxu0 0.0
    %380 = vmatprep.subr.mxu0 0.0
    %381 = vmatpush1.msra.mxu0 0.0
    %382 = vmatprep.subr.mxu0 0.0
    %383 = vmatpush1.msra.mxu0 0.0
    %384 = vmatprep.subr.mxu0 0.0
    %385 = vmatpush1.msra.mxu0 0.0
    %386 = vmatprep.subr.mxu0 0.0
    %387 = vmatpush1.msra.mxu0 0.0
    %388 = vmatprep.subr.mxu0 0.0
    %389 = vmatpush1.msra.mxu0 0.0
    %390 = vmatprep.subr.mxu0 0.0
    %391 = vmatpush1.msra.mxu0 0.0
    %392 = vmatprep.subr.mxu0 0.0
    %393 = vmatpush1.msra.mxu0 0.0
    %394 = vmatprep.subr.mxu0 0.0
    %395 = vmatpush1.msra.mxu0 0.0
    %396 = vmatprep.mubr.f32.mxu0 0.0
    %397 = vmatmul.mubr.f32.gmra.mrb[0].mxu0 %v308
    %v398 = vpop.f32.mrb[0].mxu0
    %v399 = vadd.f32 %v331, %v398
    %v400 = vpop.f32.mrb[0].mxu0
    %401 = vdwg.mxu0
    %vm402 = vcmp.gt.f32.partialorder %v399, 0.0
    %v403 = vmul.f32 %v399, 0.2
    %v404 = vsel %vm402, %v399, %v403
    %v405 = vrot.slane %v404, 4
    %v406 = vadd.f32 %v404, %v405
    %v407 = vrot.slane %v406, 2
    %v408 = vadd.f32 %v406, %v407
    %v409 = vrot.slane %v408, 1
    %v410 = vadd.f32 %v408, %v409
    %v411 = vmul.f32 %v410, 0.125
    %v412 = vmul.f32 %v404, %v404
    %v413 = vrot.slane %v412, 4
    %v414 = vadd.f32 %v412, %v413
    %v415 = vrot.slane %v414, 2
    %v416 = vadd.f32 %v414, %v415
    %v417 = vrot.slane %v416, 1
    %v418 = vadd.f32 %v416, %v417
    %v419 = vmul.f32 %v418, 0.125
    %v420 = vmul.f32 %v411, %v411
    %v421 = vsub.f32 %v419, %v420
    %v422 = vmax.f32 %v421, 0.0
    %v423 = vadd.f32 %v422, 1e-05
    %v424 = vrsqrt.pop %v423
    %v425 = vmul.f32 %v424, %v327
    %v426 = vsub.f32 %v404, %v411
    %v427 = vlaneseq
    %v428 = vshrl.u32 %v427, 7
    %v429 = vsub.s32 1, %v428
    %v430 = vrot.slane %v425, %v429
    %v431 = vmul.f32 %v426, %v430
    %v432 = vlaneseq
    %v433 = vshrl.u32 %v432, 7
    %v434 = vsub.s32 2, %v433
    %v435 = vrot.slane %v327, %v434
    %v436 = vadd.f32 %v431, %v435
    %437 = vst [vmem:[#allocation8] sm:$0xff] %v436
    // Predicated region
    $region26: #{tpu_custom_call.1} parent=1 // pred_check
      _
    $region27: #{tpu_custom_call.1} parent=1 // pred_check_branch
      %439 = sbr.rel (0) target = $region29
    $region28: #{tpu_custom_call.1} parent=1 // pred_region
      %s441 = ssub.s32 128, 128
      %442 = vsyncadd [#allocation4], %s441
      %s444 = sshll.u32 [#allocation8], 4
      %s445 = int_to_ptr.vmem [resolvable:$true] %s444
      %447 = dma.vmem_to_hbm [thread:$0]  %s445, 128, %s3, [#allocation4]
    $region29: #{tpu_custom_call.1} parent=1 // pred_fallthru
      _
    // Predicated region
    $region30: #{tpu_custom_call.1} parent=1 // pred_check
      _
    $region31: #{tpu_custom_call.1} parent=1 // pred_check_branch
      %449 = sbr.rel (0) target = $region33
    $region32: #{tpu_custom_call.1} parent=1 // pred_region
      %450 = dma.done [#allocation4], 128
    $region33: #{tpu_custom_call.1} parent=1 // pred_fallthru
      _
    %451 = vsyncpa [#allocation3], 1
    %452 = vsyncpa [#allocation6], 1
    %453 = vsyncpa [#allocation4], 1

</llo_original>
